<compile_context>
chip_gen: v7x
topology: tpu7x:2x2x1
jax: 0.10.0
libtpu: 0.0.40
codegen_flags: <defaults>
</compile_context>

<pallas_src>
import functools

import jax
import jax.numpy as jnp
from jax.experimental import pallas as pl
from jax.experimental.pallas import tpu as pltpu


# ----------------------------- helpers ---------------------------------------

def _round_up(a, m):
    return (a + m - 1) // m * m


def _cdiv(a, b):
    return -(-a // b)


def _bf16_elementwise_ok():
    """bf16 VPU exists on v6e / v7x; keep f32 elementwise on v5e and older."""
    try:
        kind = jax.devices()[0].device_kind.lower()
    except Exception:
        return False
    return any(t in kind for t in ("v6", "v7", "7x"))


# ----------------------------- kernel ----------------------------------------

def _make_kernel(n_layers, n_feature, ew_dtype):
    """Fused MLP kernel: x (tb, n_feature), w_stack (L, PW, PW), b_stack (L, 1, PW)."""

    def kernel(x_ref, w_ref, b_ref, o_ref):
        pw = w_ref.shape[1]
        h = x_ref[...]                                   # MXU-operand dtype already
        for l in range(n_layers):                        # static unroll (6 layers)
            k = n_feature if l == 0 else pw
            # Static sub-block load: first layer only consumes the real K rows,
            # so x never has to be feature-padded in HBM.
            w = w_ref[l, :k, :] if k != pw else w_ref[l]
            lhs = h if h.dtype == w_ref.dtype else h.astype(w_ref.dtype)
            acc = jnp.dot(lhs, w, preferred_element_type=jnp.float32)   # MXU, f32 acc
            h = acc.astype(ew_dtype) + b_ref[l]          # bias-add in ew dtype
            if l < n_layers - 1:
                h = jnp.maximum(h, 0.0)                  # ReLU (last layer: none)
        o_ref[...] = h.astype(o_ref.dtype)               # lane-dense slab store

    return kernel


# ----------------------------- parameter packing ------------------------------

def pack_params(params, *, use_bf16=True, ew_bf16=None):
    """Cast / zero-pad / stack all layers once (hoisted out of the hot path).

    params: list of (W_t, b) per layer, W_t shaped (in, out), b shaped (1, out)
            or (out,).
    Returns (w_stack, b_stack, layer_dims) with
        w_stack: (L, PW, PW) in the MXU operand dtype,
        b_stack: (L, 1, PW)  in the elementwise dtype,
        layer_dims: tuple of true (in, out) per layer.
    """
    if ew_bf16 is None:
        ew_bf16 = use_bf16 and _bf16_elementwise_ok()
    w_dtype = jnp.bfloat16 if use_bf16 else jnp.float32
    ew_dtype = jnp.bfloat16 if (use_bf16 and ew_bf16) else jnp.float32

    layer_dims = tuple((int(w.shape[0]), int(w.shape[1])) for w, _ in params)
    pw = _round_up(max(max(d) for d in layer_dims), 128)

    ws, bs = [], []
    for (w, b) in params:
        din, dout = w.shape
        ws.append(jnp.pad(w.astype(w_dtype), ((0, pw - din), (0, pw - dout))))
        b_row = jnp.reshape(b, (1, -1)).astype(ew_dtype)
        bs.append(jnp.pad(b_row, ((0, 0), (0, pw - dout))))
    return jnp.stack(ws), jnp.stack(bs), layer_dims


# ----------------------------- forward ----------------------------------------

def sae_dnn_forward_packed(x, w_stack, b_stack, *, layer_dims, tile_b=1024):
    """Forward with pre-packed parameters (jit-friendly; prep already hoisted)."""
    B, n_feature = x.shape
    L, pw, _ = w_stack.shape
    n_output = layer_dims[-1][1]
    assert n_feature == layer_dims[0][0]

    in_dtype = x.dtype
    x = x.astype(w_stack.dtype)            # cast once: halves input HBM read (bf16)

    # --- batch tiling: sublane granularity 16 (covers f32 and bf16 tiles), and an
    # --- even grid >= 2 whenever possible so v7x megacore shards the batch axis.
    g = 16
    bg = _round_up(B, g)
    tile_req = max(g, _round_up(int(tile_b), g))
    if bg <= g:
        tb, b_pad, grid = bg, bg, 1
    else:
        n_tiles = max(2, _cdiv(bg, tile_req))
        n_tiles += n_tiles % 2                           # even tile count
        tb = _round_up(_cdiv(bg, n_tiles), g)
        b_pad = _round_up(bg, tb)
        grid = b_pad // tb
        if grid > 1 and grid % 2:                        # re-even after rounding
            grid += 1
            b_pad = grid * tb

    x_p = jnp.pad(x, ((0, b_pad - B), (0, 0)))

    ew_dtype = b_stack.dtype
    # bf16 output slab: lane-dense unmasked vst, half the writeback bytes.
    out_dtype = jnp.bfloat16 if w_stack.dtype == jnp.bfloat16 else jnp.float32

    kernel = _make_kernel(L, n_feature, ew_dtype)

    # CostEstimate with TRUE dims (no padded-width inflation).
    flops = sum(2 * B * din * dout for din, dout in layer_dims)
    bytes_accessed = (x_p.size * x_p.dtype.itemsize
                      + w_stack.size * w_stack.dtype.itemsize
                      + b_stack.size * b_stack.dtype.itemsize
                      + b_pad * pw * jnp.dtype(out_dtype).itemsize)

    out = pl.pallas_call(
        kernel,
        out_shape=jax.ShapeDtypeStruct((b_pad, pw), out_dtype),
        grid_spec=pltpu.PrefetchScalarGridSpec(
            num_scalar_prefetch=0,
            grid=(grid,),
            in_specs=[
                pl.BlockSpec((tb, n_feature), lambda i: (i, 0)),   # batch-tiled x
                pl.BlockSpec((L, pw, pw), lambda i: (0, 0, 0)),    # resident weights
                pl.BlockSpec((L, 1, pw), lambda i: (0, 0, 0)),     # resident biases
            ],
            out_specs=pl.BlockSpec((tb, pw), lambda i: (i, 0)),
        ),
        compiler_params=pltpu.CompilerParams(
            dimension_semantics=("parallel",)),
        cost_estimate=pl.CostEstimate(
            flops=flops, transcendentals=0, bytes_accessed=bytes_accessed),
    )(x_p, w_stack, b_stack)

    return out[:B, :n_output].astype(in_dtype)


def sae_dnn_forward(x, params, *, tile_b=1024, use_bf16=True, ew_bf16=None):
    """Convenience wrapper: pack params (once per call) then run the fused kernel."""
    w_stack, b_stack, dims = pack_params(params, use_bf16=use_bf16, ew_bf16=ew_bf16)
    return sae_dnn_forward_packed(x, w_stack, b_stack, layer_dims=dims, tile_b=tile_b)


# ----------------------------- reference / test --------------------------------

def _init_linear(key, n_in, n_out, dtype=jnp.float32):
    """Deterministic init: weight (in, out) already transposed, bias (1, out)."""
    kw, kb = jax.random.split(key)
    bound = 1.0 / jnp.sqrt(jnp.float32(n_in))
    w = jax.random.uniform(kw, (n_in, n_out), dtype, -bound, bound)
    b = jax.random.uniform(kb, (1, n_out), dtype, -bound, bound)
    return w, b


def _reference_forward(x, params):
    h = x
    for i, (w, b) in enumerate(params):
        h = h @ w + b
        if i < len(params) - 1:
            h = jnp.maximum(h, 0.0)
    return h


if __name__ == "__main__":
    # Shapes consistent with SAE_DNN(n_feature, n_AE1, n_AE2, n_AE3, n_D, n_output).
    # Ragged batch (200) on purpose: exercises pad-to-tile, even grid (=2), slicing.
    B = 200
    n_feature, n_AE1, n_AE2, n_AE3, n_D, n_output = 32, 64, 48, 32, 32, 2

    key = jax.random.PRNGKey(0)
    keys = jax.random.split(key, 7)

    x = jax.random.normal(keys[0], (B, n_feature), jnp.float32)

    layer_dims = [(n_feature, n_AE1), (n_AE1, n_AE2), (n_AE2, n_AE3),
                  (n_AE3, n_D), (n_D, n_D), (n_D, n_output)]
    params = [_init_linear(keys[i + 1], din, dout)
              for i, (din, dout) in enumerate(layer_dims)]

    ref = _reference_forward(x, params)

    # Exact f32 path (f32 MXU operands, f32 elementwise, f32 output): tight check.
    out_f32 = jax.block_until_ready(
        sae_dnn_forward(x, params, tile_b=64, use_bf16=False))
    assert out_f32.shape == (B, n_output)
    assert jnp.allclose(out_f32, ref, atol=1e-4, rtol=1e-4)

    # Default fast path: bf16 MXU operands / f32 accumulate, bf16 output slab,
    # elementwise dtype chosen per TPU generation, even grid >= 2.
    out_bf16 = jax.block_until_ready(sae_dnn_forward(x, params, tile_b=1024))
    assert out_bf16.shape == (B, n_output)
    assert jnp.allclose(out_bf16, ref, atol=5e-2, rtol=5e-2)

    # Hoisted-prep path: pack params once, jit the packed forward (prep off the
    # hot path; static tile/layer config baked via partial).
    w_stack, b_stack, dims = pack_params(params, use_bf16=True)
    fwd = jax.jit(functools.partial(
        sae_dnn_forward_packed, layer_dims=dims, tile_b=1024))
    out_jit = jax.block_until_ready(fwd(x, w_stack, b_stack))
    assert out_jit.shape == (B, n_output)
    assert jnp.allclose(out_jit, ref, atol=5e-2, rtol=5e-2)

    print("KERNEL_OK")
</pallas_src>

<mosaic_0001>
module attributes {stable_mosaic.version = 11 : i64} {
  func.func @kernel(%arg0: i32, %arg1: memref<64x32xf32, #tpu.memory_space<vmem>>, %arg2: memref<6x128x128xf32, #tpu.memory_space<vmem>>, %arg3: memref<6x1x128xf32, #tpu.memory_space<vmem>>, %arg4: memref<64x128xf32, #tpu.memory_space<vmem>>) attributes {dimension_semantics = [#tpu.dimension_semantics<parallel>], iteration_bounds = array<i64: 4>, scalar_prefetch = 0 : i64, scratch_operands = 0 : i64, tpu.core_type = #tpu.core_type<tc>, window_params = [{transform_indices = @transform_0, window_bounds = array<i64: 64, 32>}, {pipeline_mode = #tpu.pipeline_mode<synchronous>, transform_indices = @transform_1, window_bounds = array<i64: 6, 128, 128>}, {pipeline_mode = #tpu.pipeline_mode<synchronous>, transform_indices = @transform_2, window_bounds = array<i64: 6, 1, 128>}, {transform_indices = @transform_3, window_bounds = array<i64: 64, 128>}]} {
    %c0 = arith.constant 0 : index
    %c0_0 = arith.constant 0 : index
    %0 = vector.load %arg1[%c0, %c0_0] : memref<64x32xf32, #tpu.memory_space<vmem>>, vector<64x32xf32>
    %c0_1 = arith.constant 0 : index
    %c0_2 = arith.constant 0 : index
    %c0_3 = arith.constant 0 : index
    %1 = vector.load %arg2[%c0_1, %c0_2, %c0_3] : memref<6x128x128xf32, #tpu.memory_space<vmem>>, vector<1x32x128xf32>
    %2 = vector.shape_cast %1 : vector<1x32x128xf32> to vector<32x128xf32>
    %cst = arith.constant dense<0.000000e+00> : vector<64x128xf32>
    %3 = tpu.matmul %0, %2, %cst {dimension_numbers = #tpu.dot_dimension_numbers<[1], [0], [0], [1], [0, 0, 1, 1], [], []>} : vector<64x32xf32>, vector<32x128xf32>, vector<64x128xf32> -> vector<64x128xf32>
    %c0_4 = arith.constant 0 : index
    %c0_5 = arith.constant 0 : index
    %c0_6 = arith.constant 0 : index
    %4 = vector.load %arg3[%c0_4, %c0_5, %c0_6] : memref<6x1x128xf32, #tpu.memory_space<vmem>>, vector<1x1x128xf32>
    %5 = vector.shape_cast %4 : vector<1x1x128xf32> to vector<1x128xf32>
    %6 = vector.broadcast %5 : vector<1x128xf32> to vector<64x128xf32>
    %7 = arith.addf %3, %6 : vector<64x128xf32>
    %cst_7 = arith.constant 0.000000e+00 : f32
    %8 = vector.broadcast %cst_7 : f32 to vector<64x128xf32>
    %9 = arith.maximumf %7, %8 : vector<64x128xf32>
    %c1 = arith.constant 1 : index
    %c0_8 = arith.constant 0 : index
    %c0_9 = arith.constant 0 : index
    %10 = vector.load %arg2[%c1, %c0_8, %c0_9] : memref<6x128x128xf32, #tpu.memory_space<vmem>>, vector<1x128x128xf32>
    %11 = vector.shape_cast %10 : vector<1x128x128xf32> to vector<128x128xf32>
    %cst_10 = arith.constant dense<0.000000e+00> : vector<64x128xf32>
    %12 = tpu.matmul %9, %11, %cst_10 {dimension_numbers = #tpu.dot_dimension_numbers<[1], [0], [0], [1], [0, 0, 1, 1], [], []>} : vector<64x128xf32>, vector<128x128xf32>, vector<64x128xf32> -> vector<64x128xf32>
    %c1_11 = arith.constant 1 : index
    %c0_12 = arith.constant 0 : index
    %c0_13 = arith.constant 0 : index
    %13 = vector.load %arg3[%c1_11, %c0_12, %c0_13] : memref<6x1x128xf32, #tpu.memory_space<vmem>>, vector<1x1x128xf32>
    %14 = vector.shape_cast %13 : vector<1x1x128xf32> to vector<1x128xf32>
    %15 = vector.broadcast %14 : vector<1x128xf32> to vector<64x128xf32>
    %16 = arith.addf %12, %15 : vector<64x128xf32>
    %cst_14 = arith.constant 0.000000e+00 : f32
    %17 = vector.broadcast %cst_14 : f32 to vector<64x128xf32>
    %18 = arith.maximumf %16, %17 : vector<64x128xf32>
    %c2 = arith.constant 2 : index
    %c0_15 = arith.constant 0 : index
    %c0_16 = arith.constant 0 : index
    %19 = vector.load %arg2[%c2, %c0_15, %c0_16] : memref<6x128x128xf32, #tpu.memory_space<vmem>>, vector<1x128x128xf32>
    %20 = vector.shape_cast %19 : vector<1x128x128xf32> to vector<128x128xf32>
    %cst_17 = arith.constant dense<0.000000e+00> : vector<64x128xf32>
    %21 = tpu.matmul %18, %20, %cst_17 {dimension_numbers = #tpu.dot_dimension_numbers<[1], [0], [0], [1], [0, 0, 1, 1], [], []>} : vector<64x128xf32>, vector<128x128xf32>, vector<64x128xf32> -> vector<64x128xf32>
    %c2_18 = arith.constant 2 : index
    %c0_19 = arith.constant 0 : index
    %c0_20 = arith.constant 0 : index
    %22 = vector.load %arg3[%c2_18, %c0_19, %c0_20] : memref<6x1x128xf32, #tpu.memory_space<vmem>>, vector<1x1x128xf32>
    %23 = vector.shape_cast %22 : vector<1x1x128xf32> to vector<1x128xf32>
    %24 = vector.broadcast %23 : vector<1x128xf32> to vector<64x128xf32>
    %25 = arith.addf %21, %24 : vector<64x128xf32>
    %cst_21 = arith.constant 0.000000e+00 : f32
    %26 = vector.broadcast %cst_21 : f32 to vector<64x128xf32>
    %27 = arith.maximumf %25, %26 : vector<64x128xf32>
    %c3 = arith.constant 3 : index
    %c0_22 = arith.constant 0 : index
    %c0_23 = arith.constant 0 : index
    %28 = vector.load %arg2[%c3, %c0_22, %c0_23] : memref<6x128x128xf32, #tpu.memory_space<vmem>>, vector<1x128x128xf32>
    %29 = vector.shape_cast %28 : vector<1x128x128xf32> to vector<128x128xf32>
    %cst_24 = arith.constant dense<0.000000e+00> : vector<64x128xf32>
    %30 = tpu.matmul %27, %29, %cst_24 {dimension_numbers = #tpu.dot_dimension_numbers<[1], [0], [0], [1], [0, 0, 1, 1], [], []>} : vector<64x128xf32>, vector<128x128xf32>, vector<64x128xf32> -> vector<64x128xf32>
    %c3_25 = arith.constant 3 : index
    %c0_26 = arith.constant 0 : index
    %c0_27 = arith.constant 0 : index
    %31 = vector.load %arg3[%c3_25, %c0_26, %c0_27] : memref<6x1x128xf32, #tpu.memory_space<vmem>>, vector<1x1x128xf32>
    %32 = vector.shape_cast %31 : vector<1x1x128xf32> to vector<1x128xf32>
    %33 = vector.broadcast %32 : vector<1x128xf32> to vector<64x128xf32>
    %34 = arith.addf %30, %33 : vector<64x128xf32>
    %cst_28 = arith.constant 0.000000e+00 : f32
    %35 = vector.broadcast %cst_28 : f32 to vector<64x128xf32>
    %36 = arith.maximumf %34, %35 : vector<64x128xf32>
    %c4 = arith.constant 4 : index
    %c0_29 = arith.constant 0 : index
    %c0_30 = arith.constant 0 : index
    %37 = vector.load %arg2[%c4, %c0_29, %c0_30] : memref<6x128x128xf32, #tpu.memory_space<vmem>>, vector<1x128x128xf32>
    %38 = vector.shape_cast %37 : vector<1x128x128xf32> to vector<128x128xf32>
    %cst_31 = arith.constant dense<0.000000e+00> : vector<64x128xf32>
    %39 = tpu.matmul %36, %38, %cst_31 {dimension_numbers = #tpu.dot_dimension_numbers<[1], [0], [0], [1], [0, 0, 1, 1], [], []>} : vector<64x128xf32>, vector<128x128xf32>, vector<64x128xf32> -> vector<64x128xf32>
    %c4_32 = arith.constant 4 : index
    %c0_33 = arith.constant 0 : index
    %c0_34 = arith.constant 0 : index
    %40 = vector.load %arg3[%c4_32, %c0_33, %c0_34] : memref<6x1x128xf32, #tpu.memory_space<vmem>>, vector<1x1x128xf32>
    %41 = vector.shape_cast %40 : vector<1x1x128xf32> to vector<1x128xf32>
    %42 = vector.broadcast %41 : vector<1x128xf32> to vector<64x128xf32>
    %43 = arith.addf %39, %42 : vector<64x128xf32>
    %cst_35 = arith.constant 0.000000e+00 : f32
    %44 = vector.broadcast %cst_35 : f32 to vector<64x128xf32>
    %45 = arith.maximumf %43, %44 : vector<64x128xf32>
    %c5 = arith.constant 5 : index
    %c0_36 = arith.constant 0 : index
    %c0_37 = arith.constant 0 : index
    %46 = vector.load %arg2[%c5, %c0_36, %c0_37] : memref<6x128x128xf32, #tpu.memory_space<vmem>>, vector<1x128x128xf32>
    %47 = vector.shape_cast %46 : vector<1x128x128xf32> to vector<128x128xf32>
    %cst_38 = arith.constant dense<0.000000e+00> : vector<64x128xf32>
    %48 = tpu.matmul %45, %47, %cst_38 {dimension_numbers = #tpu.dot_dimension_numbers<[1], [0], [0], [1], [0, 0, 1, 1], [], []>} : vector<64x128xf32>, vector<128x128xf32>, vector<64x128xf32> -> vector<64x128xf32>
    %c5_39 = arith.constant 5 : index
    %c0_40 = arith.constant 0 : index
    %c0_41 = arith.constant 0 : index
    %49 = vector.load %arg3[%c5_39, %c0_40, %c0_41] : memref<6x1x128xf32, #tpu.memory_space<vmem>>, vector<1x1x128xf32>
    %50 = vector.shape_cast %49 : vector<1x1x128xf32> to vector<1x128xf32>
    %51 = vector.broadcast %50 : vector<1x128xf32> to vector<64x128xf32>
    %52 = arith.addf %48, %51 : vector<64x128xf32>
    %c0_42 = arith.constant 0 : index
    %c0_43 = arith.constant 0 : index
    %53 = vector.load %arg4[%c0_42, %c0_43] : memref<64x128xf32, #tpu.memory_space<vmem>>, vector<64x128xf32>
    tpu.vector_store %arg4[%c0_42, %c0_43], %52 {strides = array<i32>} : memref<64x128xf32, #tpu.memory_space<vmem>>, vector<64x128xf32>,
    return
  }
  func.func @transform_0(%arg0: i32) -> (i32, i32) {
    %c0_i32 = arith.constant 0 : i32
    %c0_i32_0 = arith.constant 0 : i32
    return %arg0, %c0_i32 : i32, i32
  }
  func.func @transform_1(%arg0: i32) -> (i32, i32, i32) {
    %c0_i32 = arith.constant 0 : i32
    %c0_i32_0 = arith.constant 0 : i32
    %c0_i32_1 = arith.constant 0 : i32
    %c0_i32_2 = arith.constant 0 : i32
    return %c0_i32, %c0_i32_0, %c0_i32_1 : i32, i32, i32
  }
  func.func @transform_2(%arg0: i32) -> (i32, i32, i32) {
    %c0_i32 = arith.constant 0 : i32
    %c0_i32_0 = arith.constant 0 : i32
    %c0_i32_1 = arith.constant 0 : i32
    %c0_i32_2 = arith.constant 0 : i32
    return %c0_i32, %c0_i32_0, %c0_i32_1 : i32, i32, i32
  }
  func.func @transform_3(%arg0: i32) -> (i32, i32) {
    %c0_i32 = arith.constant 0 : i32
    %c0_i32_0 = arith.constant 0 : i32
    return %arg0, %c0_i32 : i32, i32
  }
}

</mosaic_0001>

<llo_original>
// kernel: tpu_custom_call.1
$region0: #{tpu_custom_call.1}
  #allocation0 [shape = 'u32[]', space=smem, size = 0x4, offset = 0x4, fixed_abs, tag = 'smem constant byte address 0x4 - core index']
  #allocation1 [shape = 'u32[144,128]{1,0:T(1,128)}', space=vmem, size = 0x12000, scoped, tag = 'internal scratch']
  %s0 = inlined_call_operand.vmem [shape: f32[256,32], index: 0, kind: input, shape index: {}]
  %s1 = inlined_call_operand.hbm [shape: f32[6,128,128], index: 1, kind: input, shape index: {}]
  %s2 = inlined_call_operand.vmem [shape: f32[6,1,128], index: 2, kind: input, shape index: {}]
  %s3 = inlined_call_operand.hbm [shape: f32[256,128], index: 3, kind: output, shape index: {}]
  %s4 = sld [smem:[#allocation0]]
  $region49: #{tpu_custom_call.1} parent=0
    _
  %s6 = ssub.s32 1, %s4
  %s7 = scalar_select 0, %s6, %s4
  $region1: #{tpu_custom_call.1} parent=0
    #allocation2 [shape = 'u8[393216]{0}', space=vmem, size = 0x60000, scoped, tag = 'input window, operand 1, single buffered']
    #allocation3 [shape = 's32[2]{0}', space=sflag, size = 0x8, scoped, tag = 'scoped memory for tpu_custom_call.1']
    #allocation4 [shape = 's32[2]{0}', space=sflag, size = 0x8, scoped, tag = 'scoped memory for tpu_custom_call.1']
    #allocation5 [shape = 'u8[65536]{0}', space=vmem, size = 0x10000, scoped, tag = 'output window, operand 0']
    %8 = vsyncpa [#allocation3], 0
    %9 = vsyncpa [#allocation4], 0
    %s10 = scalar_lea.sflag [#allocation4], 1
    %11 = vsyncpa %s10, 0
    loop: start=0, step=1, limit=6
    $region2: #{tpu_custom_call.1} parent=1 // loop_pre_header
      _
    $region3: #{tpu_custom_call.1} parent=1 // loop_header
      %s13 = sphi 0, %s17
      %p14 = scmp.ge.s32.totalorder %s13, 6
      %s23 = sphi 0, %s25
      %s26 = sphi 0, %s23
      %s27 = sphi 0, %s26
      %s43 = sphi 0, %s27
      %s47 = sphi 0, %s47
      %s49 = sphi 0, %s47
      %s50 = sphi 0, %s49
      %s64 = sphi 0, %s50
      %s68 = sphi 0, %s68
      %s70 = sphi 0, %s68
      %s71 = sphi 0, %s70
      %s85 = sphi 0, %s71
      %s91 = sphi 0, %s93
      %s94 = sphi 0, %s91
      %s95 = sphi 0, %s94
      %s111 = sphi 0, %s95
    $region4: #{tpu_custom_call.1} parent=1 // loop_header_branch
      %16 = sbr.rel (%p14) target = $region8
    $region5: #{tpu_custom_call.1} parent=1 // loop_body
      %s18 = ssub.s32 %s13, 1
      %s19 = ssub.s32 %s13, 2
      %s20 = sadd.s32 %s13, 1
      %s21 = ssub.s32 %s13, %s20
      %p22 = scmp.eq.s32.totalorder %s21, 0
      %s24 = sadd.s32 %s23, 1
      %s25 = scalar_select %p22, %s23, %s24
      %p28 = pneg %p22
      %p29 = scmp.eq.s32.totalorder %s13, 3
      %p30 = por %p28, %p29
      %p31 = scmp.ne.s32.totalorder %s23, %s26
      %p32 = scmp.eq.s32.totalorder %s13, 0
      %p33 = por %p31, %p32
      %p34 = scmp.ne.s32.totalorder %s23, %s26
      %p35 = scmp.eq.s32.totalorder %s18, 3
      %p36 = por %p34, %p35
      %p37 = scmp.ne.s32.totalorder %s26, %s27
      %p38 = scmp.eq.s32.totalorder %s18, 0
      %p39 = por %p37, %p38
      %p40 = scmp.ne.s32.totalorder %s26, %s27
      %p41 = scmp.eq.s32.totalorder %s19, 3
      %p42 = por %p40, %p41
      %p44 = scmp.ne.s32.totalorder %s27, %s43
      %p45 = scmp.eq.s32.totalorder %s19, 0
      %p46 = por %p44, %p45
      %s48 = sadd.s32 %s47, 1
      %p51 = scmp.eq.s32.totalorder %s13, 3
      %p52 = scmp.ne.s32.totalorder %s47, %s49
      %p53 = scmp.eq.s32.totalorder %s13, 0
      %p54 = por %p52, %p53
      %p55 = scmp.ne.s32.totalorder %s47, %s49
      %p56 = scmp.eq.s32.totalorder %s18, 3
      %p57 = por %p55, %p56
      %p58 = scmp.ne.s32.totalorder %s49, %s50
      %p59 = scmp.eq.s32.totalorder %s18, 0
      %p60 = por %p58, %p59
      %p61 = scmp.ne.s32.totalorder %s49, %s50
      %p62 = scmp.eq.s32.totalorder %s19, 3
      %p63 = por %p61, %p62
      %p65 = scmp.ne.s32.totalorder %s50, %s64
      %p66 = scmp.eq.s32.totalorder %s19, 0
      %p67 = por %p65, %p66
      %s69 = sadd.s32 %s68, 1
      %p72 = scmp.eq.s32.totalorder %s13, 3
      %p73 = scmp.ne.s32.totalorder %s68, %s70
      %p74 = scmp.eq.s32.totalorder %s13, 0
      %p75 = por %p73, %p74
      %p76 = scmp.ne.s32.totalorder %s68, %s70
      %p77 = scmp.eq.s32.totalorder %s18, 3
      %p78 = por %p76, %p77
      %p79 = scmp.ne.s32.totalorder %s70, %s71
      %p80 = scmp.eq.s32.totalorder %s18, 0
      %p81 = por %p79, %p80
      %p82 = scmp.ne.s32.totalorder %s70, %s71
      %p83 = scmp.eq.s32.totalorder %s19, 3
      %p84 = por %p82, %p83
      %p86 = scmp.ne.s32.totalorder %s71, %s85
      %p87 = scmp.eq.s32.totalorder %s19, 0
      %p88 = por %p86, %p87
      %s89 = ssub.s32 %s13, %s20
      %p90 = scmp.eq.s32.totalorder %s89, 0
      %s92 = sadd.s32 %s91, 1
      %s93 = scalar_select %p90, %s91, %s92
      %p96 = pneg %p90
      %p97 = scmp.eq.s32.totalorder %s13, 3
      %p98 = por %p96, %p97
      %p99 = scmp.ne.s32.totalorder %s91, %s94
      %p100 = scmp.eq.s32.totalorder %s13, 0
      %p101 = por %p99, %p100
      %p102 = scmp.ne.s32.totalorder %s91, %s94
      %p103 = scmp.eq.s32.totalorder %s18, 3
      %p104 = por %p102, %p103
      %p105 = scmp.ne.s32.totalorder %s94, %s95
      %p106 = scmp.eq.s32.totalorder %s18, 0
      %p107 = por %p105, %p106
      %p108 = scmp.ne.s32.totalorder %s94, %s95
      %p109 = scmp.eq.s32.totalorder %s19, 3
      %p110 = por %p108, %p109
      %p112 = scmp.ne.s32.totalorder %s95, %s111
      %p113 = scmp.eq.s32.totalorder %s19, 0
      %p114 = por %p112, %p113
      %p115 = scmp.le.s32.totalorder 1, %s13
      %p116 = scmp.lt.s32.totalorder %s13, 5
      %p117 = pnand %p115, %p116
      %p118 = pneg %p117
      // Predicated region
      $region9: #{tpu_custom_call.1} parent=5 // pred_check
        _
      $region10: #{tpu_custom_call.1} parent=5 // pred_check_branch
        %120 = sbr.rel (%p117) target = $region12
      $region11: #{tpu_custom_call.1} parent=5 // pred_region
        %s121 = ssub.s32 %s13, 1
        // Predicated region
        $region13: #{tpu_custom_call.1} parent=11 // pred_check
          %p122 = pneg %p60
        $region14: #{tpu_custom_call.1} parent=11 // pred_check_branch
          %124 = sbr.rel (%p122) target = $region16
        $region15: #{tpu_custom_call.1} parent=11 // pred_region
          %s126 = ssub.s32 12288, 12288
          %127 = vsyncadd [#allocation3], %s126
          %s128 = sshll.u32 [#allocation2], 4
          %s129 = int_to_ptr.vmem [resolvable:$true] %s128
          %134 = dma.hbm_to_vmem [thread:$0]  %s1, 12288, %s129, [#allocation3], 128, 128, 8
        $region16: #{tpu_custom_call.1} parent=11 // pred_fallthru
          _
        // Predicated region
        $region17: #{tpu_custom_call.1} parent=11 // pred_check
          %p135 = pneg %p81
        $region18: #{tpu_custom_call.1} parent=11 // pred_check_branch
          %137 = sbr.rel (%p135) target = $region20
        $region19: #{tpu_custom_call.1} parent=11 // pred_region
          _
        $region20: #{tpu_custom_call.1} parent=11 // pred_fallthru
          _
      $region12: #{tpu_custom_call.1} parent=5 // pred_fallthru
        _
      %p138 = scmp.lt.s32.totalorder %s13, 4
      // Predicated region
      $region21: #{tpu_custom_call.1} parent=5 // pred_check
        %p139 = pneg %p138
      $region22: #{tpu_custom_call.1} parent=5 // pred_check_branch
        %141 = sbr.rel (%p139) target = $region24
      $region23: #{tpu_custom_call.1} parent=5 // pred_region
        // Predicated region
        $region25: #{tpu_custom_call.1} parent=23 // pred_check
          %p142 = pneg %p33
        $region26: #{tpu_custom_call.1} parent=23 // pred_check_branch
          %144 = sbr.rel (%p142) target = $region28
        $region27: #{tpu_custom_call.1} parent=23 // pred_region
          %s145 = smul.u32 8, %s13
          %p146 = scmp.lt.s32.totalorder %s145, 31
          %s147 = scalar_select %p146, %s145, 31
          %s148 = smul.addr %s147, 8
          %s149 = scalar_lea.vmem %s0, %s148
          %s150 = smul.u32 8, %s13
        $region28: #{tpu_custom_call.1} parent=23 // pred_fallthru
          _
      $region24: #{tpu_custom_call.1} parent=5 // pred_fallthru
        _
      %p151 = scmp.le.s32.totalorder 1, %s13
      %p152 = scmp.lt.s32.totalorder %s13, 5
      %p153 = pnand %p151, %p152
      %p154 = pneg %p153
      // Predicated region
      $region29: #{tpu_custom_call.1} parent=5 // pred_check
        _
      $region30: #{tpu_custom_call.1} parent=5 // pred_check_branch
        %156 = sbr.rel (%p153) target = $region32
      $region31: #{tpu_custom_call.1} parent=5 // pred_region
        %s157 = ssub.s32 %s13, 1
        // Predicated region
        $region33: #{tpu_custom_call.1} parent=31 // pred_check
          %p158 = pneg %p60
        $region34: #{tpu_custom_call.1} parent=31 // pred_check_branch
          %160 = sbr.rel (%p158) target = $region36
        $region35: #{tpu_custom_call.1} parent=31 // pred_region
          %161 = dma.done [#allocation3], 12288
        $region36: #{tpu_custom_call.1} parent=31 // pred_fallthru
          _
        %s162 = smul.u32 8, %s18
        %p163 = scmp.lt.s32.totalorder %s162, 31
        %s164 = scalar_select %p163, %s162, 31
        %s165 = smul.addr %s164, 8
        %s166 = scalar_lea.vmem %s0, %s165
        %p167 = pneg %p39
        %p168 = pneg %p36
        %p169 = pneg %p60
        %p170 = pneg %p57
        %p171 = pneg %p81
        %p172 = pneg %p78
        %p173 = pneg %p107
        %p174 = pneg %p104
        %s175 = sand.u32 %s94, 1
        %s176 = scalar_lea.sflag [#allocation4], %s175
        %s177 = sand.u32 %s94, 1
        %s178 = smul.addr %s177, 64
        %s179 = scalar_lea.vmem [#allocation5], %s178
        %s180 = smul.u32 8, %s18
        %p181 = scmp.lt.s32.totalorder %s180, 31
        %s182 = scalar_select %p181, %s180, 31
        %s183 = smul.addr %s182, 8
        %s184 = scalar_lea.vmem %s0, %s183
        %s185 = smul.u32 8, %s18
        %s186 = smul.u32 8, %s18
        %v187 = vld [vmem:[%s184] sm:$0xff]
        %v188 = vld [vmem:[%s184 + $0x8] sm:$0xff]
        %v189 = vld [vmem:[%s184 + $0x10] sm:$0xff]
        %v190 = vld [vmem:[%s184 + $0x18] sm:$0xff]
        %v191 = vld [vmem:[%s184 + $0x20] sm:$0xff]
        %v192 = vld [vmem:[%s184 + $0x28] sm:$0xff]
        %v193 = vld [vmem:[%s184 + $0x30] sm:$0xff]
        %v194 = vld [vmem:[%s184 + $0x38] sm:$0xff]
        %v195 = vld [vmem:[#allocation2] sm:$0xff]
        %v196 = vld [vmem:[#allocation2 + $0x8] sm:$0xff]
        %v197 = vld [vmem:[#allocation2 + $0x10] sm:$0xff]
        %v198 = vld [vmem:[#allocation2 + $0x18] sm:$0xff]
        %v199 = vld [vmem:[%s2] sm:$0x1]
        %v201 = vlaneseq
        %v202 = vshrl.u32 %v201, 7
        %v203 = vsub.s32 0, %v202
        %v204 = vrot.slane %v199, %v203
        %vm206 = vcmask 261120
        %v208 = vsel %vm206, %v187, 0
        %v211 = vsel %vm206, %v188, 0
        %v214 = vsel %vm206, %v189, 0
        %v217 = vsel %vm206, %v190, 0
        %v220 = vsel %vm206, %v191, 0
        %v223 = vsel %vm206, %v192, 0
        %v226 = vsel %vm206, %v193, 0
        %v229 = vsel %vm206, %v194, 0
        %231 = vmatprep.subr.mxu0 0.0
        %232 = vmatpush1.msra.mxu0 %v195
        %233 = vmatprep.subr.mxu0 0.0
        %234 = vmatpush1.msra.mxu0 %v196
        %235 = vmatprep.subr.mxu0 0.0
        %236 = vmatpush1.msra.mxu0 %v197
        %237 = vmatprep.subr.mxu0 0.0
        %238 = vmatpush1.msra.mxu0 %v198
        %239 = vmatprep.subr.mxu0 0.0
        %240 = vmatpush1.msra.mxu0 0.0
        %241 = vmatprep.subr.mxu0 0.0
        %242 = vmatpush1.msra.mxu0 0.0
        %243 = vmatprep.subr.mxu0 0.0
        %244 = vmatpush1.msra.mxu0 0.0
        %245 = vmatprep.subr.mxu0 0.0
        %246 = vmatpush1.msra.mxu0 0.0
        %247 = vmatprep.subr.mxu0 0.0
        %248 = vmatpush1.msra.mxu0 0.0
        %249 = vmatprep.subr.mxu0 0.0
        %250 = vmatpush1.msra.mxu0 0.0
        %251 = vmatprep.subr.mxu0 0.0
        %252 = vmatpush1.msra.mxu0 0.0
        %253 = vmatprep.subr.mxu0 0.0
        %254 = vmatpush1.msra.mxu0 0.0
        %255 = vmatprep.subr.mxu0 0.0
        %256 = vmatpush1.msra.mxu0 0.0
        %257 = vmatprep.subr.mxu0 0.0
        %258 = vmatpush1.msra.mxu0 0.0
        %259 = vmatprep.subr.mxu0 0.0
        %260 = vmatpush1.msra.mxu0 0.0
        %261 = vmatprep.subr.mxu0 0.0
        %262 = vmatpush1.msra.mxu0 0.0
        %263 = vmatprep.subr.mxu0 0.0
        %264 = vmatpush1.msra.mxu0 0.0
        %265 = vmatprep.subr.mxu0 0.0
        %266 = vmatpush1.msra.mxu0 0.0
        %267 = vmatprep.subr.mxu0 0.0
        %268 = vmatpush1.msra.mxu0 0.0
        %269 = vmatprep.subr.mxu0 0.0
        %270 = vmatpush1.msra.mxu0 0.0
        %271 = vmatprep.subr.mxu0 0.0
        %272 = vmatpush1.msra.mxu0 0.0
        %273 = vmatprep.subr.mxu0 0.0
        %274 = vmatpush1.msra.mxu0 0.0
        %275 = vmatprep.subr.mxu0 0.0
        %276 = vmatpush1.msra.mxu0 0.0
        %277 = vmatprep.subr.mxu0 0.0
        %278 = vmatpush1.msra.mxu0 0.0
        %279 = vmatprep.subr.mxu0 0.0
        %280 = vmatpush1.msra.mxu0 0.0
        %281 = vmatprep.subr.mxu0 0.0
        %282 = vmatpush1.msra.mxu0 0.0
        %283 = vmatprep.subr.mxu0 0.0
        %284 = vmatpush1.msra.mxu0 0.0
        %285 = vmatprep.subr.mxu0 0.0
        %286 = vmatpush1.msra.mxu0 0.0
        %287 = vmatprep.subr.mxu0 0.0
        %288 = vmatpush1.msra.mxu0 0.0
        %289 = vmatprep.subr.mxu0 0.0
        %290 = vmatpush1.msra.mxu0 0.0
        %291 = vmatprep.subr.mxu0 0.0
        %292 = vmatpush1.msra.mxu0 0.0
        %293 = vmatprep.subr.mxu0 0.0
        %294 = vmatpush1.msra.mxu0 0.0
        %295 = vmatprep.mubr.f32.mxu0 0.0
        %296 = vmatmul.mubr.f32.gmra.mrb[0].mxu0 %v208
        %v297 = vpop.f32.mrb[0].mxu0
        %v298 = vadd.f32 %v204, %v297
        %v299 = vpop.f32.mrb[0].mxu0
        %300 = vmatprep.mubr.f32.mxu0 0.0
        %301 = vmatmul.mubr.f32.gmra.mrb[0].mxu0 %v211
        %v302 = vpop.f32.mrb[0].mxu0
        %v303 = vadd.f32 %v204, %v302
        %v304 = vpop.f32.mrb[0].mxu0
        %305 = vmatprep.mubr.f32.mxu0 0.0
        %306 = vmatmul.mubr.f32.gmra.mrb[0].mxu0 %v214
        %v307 = vpop.f32.mrb[0].mxu0
        %v308 = vadd.f32 %v204, %v307
        %v309 = vpop.f32.mrb[0].mxu0
        %310 = vmatprep.mubr.f32.mxu0 0.0
        %311 = vmatmul.mubr.f32.gmra.mrb[0].mxu0 %v217
        %v312 = vpop.f32.mrb[0].mxu0
        %v313 = vadd.f32 %v204, %v312
        %v314 = vpop.f32.mrb[0].mxu0
        %315 = vmatprep.mubr.f32.mxu0 0.0
        %316 = vmatmul.mubr.f32.gmra.mrb[0].mxu0 %v220
        %v317 = vpop.f32.mrb[0].mxu0
        %v318 = vadd.f32 %v204, %v317
        %v319 = vpop.f32.mrb[0].mxu0
        %320 = vmatprep.mubr.f32.mxu0 0.0
        %321 = vmatmul.mubr.f32.gmra.mrb[0].mxu0 %v223
        %v322 = vpop.f32.mrb[0].mxu0
        %v323 = vadd.f32 %v204, %v322
        %v324 = vpop.f32.mrb[0].mxu0
        %325 = vmatprep.mubr.f32.mxu0 0.0
        %326 = vmatmul.mubr.f32.gmra.mrb[0].mxu0 %v226
        %v327 = vpop.f32.mrb[0].mxu0
        %v328 = vadd.f32 %v204, %v327
        %v329 = vpop.f32.mrb[0].mxu0
        %330 = vmatprep.mubr.f32.mxu0 0.0
        %331 = vmatmul.mubr.f32.gmra.mrb[0].mxu0 %v229
        %v332 = vpop.f32.mrb[0].mxu0
        %v333 = vadd.f32 %v204, %v332
        %v334 = vpop.f32.mrb[0].mxu0
        %335 = vdwg.mxu0
        %v336 = vmax.f32 %v298, 0.0
        %v337 = vmax.f32 %v303, 0.0
        %v338 = vmax.f32 %v308, 0.0
        %v339 = vmax.f32 %v313, 0.0
        %v340 = vmax.f32 %v318, 0.0
        %v341 = vmax.f32 %v323, 0.0
        %v342 = vmax.f32 %v328, 0.0
        %v343 = vmax.f32 %v333, 0.0
        %s344 = scalar_lea.vmem [#allocation2], 128
        %v345 = vld [vmem:[%s344] sm:$0xff]
        %v346 = vld [vmem:[%s344 + $0x8] sm:$0xff]
        %v347 = vld [vmem:[%s344 + $0x10] sm:$0xff]
        %v348 = vld [vmem:[%s344 + $0x18] sm:$0xff]
        %v349 = vld [vmem:[%s344 + $0x20] sm:$0xff]
        %v350 = vld [vmem:[%s344 + $0x28] sm:$0xff]
        %v351 = vld [vmem:[%s344 + $0x30] sm:$0xff]
        %v352 = vld [vmem:[%s344 + $0x38] sm:$0xff]
        %v353 = vld [vmem:[%s344 + $0x40] sm:$0xff]
        %v354 = vld [vmem:[%s344 + $0x48] sm:$0xff]
        %v355 = vld [vmem:[%s344 + $0x50] sm:$0xff]
        %v356 = vld [vmem:[%s344 + $0x58] sm:$0xff]
        %v357 = vld [vmem:[%s344 + $0x60] sm:$0xff]
        %v358 = vld [vmem:[%s344 + $0x68] sm:$0xff]
        %v359 = vld [vmem:[%s344 + $0x70] sm:$0xff]
        %v360 = vld [vmem:[%s344 + $0x78] sm:$0xff]
        %s361 = scalar_lea.vmem %s2, 1
        %v362 = vld [vmem:[%s361] sm:$0x1]
        %v364 = vlaneseq
        %v365 = vshrl.u32 %v364, 7
        %v366 = vsub.s32 0, %v365
        %v367 = vrot.slane %v362, %v366
        %369 = vmatprep.subr.mxu0 0.0
        %370 = vmatpush1.msra.mxu0 %v345
        %371 = vmatprep.subr.mxu0 0.0
        %372 = vmatpush1.msra.mxu0 %v346
        %373 = vmatprep.subr.mxu0 0.0
        %374 = vmatpush1.msra.mxu0 %v347
        %375 = vmatprep.subr.mxu0 0.0
        %376 = vmatpush1.msra.mxu0 %v348
        %377 = vmatprep.subr.mxu0 0.0
        %378 = vmatpush1.msra.mxu0 %v349
        %379 = vmatprep.subr.mxu0 0.0
        %380 = vmatpush1.msra.mxu0 %v350
        %381 = vmatprep.subr.mxu0 0.0
        %382 = vmatpush1.msra.mxu0 %v351
        %383 = vmatprep.subr.mxu0 0.0
        %384 = vmatpush1.msra.mxu0 %v352
        %385 = vmatprep.subr.mxu0 0.0
        %386 = vmatpush1.msra.mxu0 %v353
        %387 = vmatprep.subr.mxu0 0.0
        %388 = vmatpush1.msra.mxu0 %v354
        %389 = vmatprep.subr.mxu0 0.0
        %390 = vmatpush1.msra.mxu0 %v355
        %391 = vmatprep.subr.mxu0 0.0
        %392 = vmatpush1.msra.mxu0 %v356
        %393 = vmatprep.subr.mxu0 0.0
        %394 = vmatpush1.msra.mxu0 %v357
        %395 = vmatprep.subr.mxu0 0.0
        %396 = vmatpush1.msra.mxu0 %v358
        %397 = vmatprep.subr.mxu0 0.0
        %398 = vmatpush1.msra.mxu0 %v359
        %399 = vmatprep.subr.mxu0 0.0
        %400 = vmatpush1.msra.mxu0 %v360
        %401 = vmatprep.subr.mxu0 0.0
        %402 = vmatpush1.msra.mxu0 0.0
        %403 = vmatprep.subr.mxu0 0.0
        %404 = vmatpush1.msra.mxu0 0.0
        %405 = vmatprep.subr.mxu0 0.0
        %406 = vmatpush1.msra.mxu0 0.0
        %407 = vmatprep.subr.mxu0 0.0
        %408 = vmatpush1.msra.mxu0 0.0
        %409 = vmatprep.subr.mxu0 0.0
        %410 = vmatpush1.msra.mxu0 0.0
        %411 = vmatprep.subr.mxu0 0.0
        %412 = vmatpush1.msra.mxu0 0.0
        %413 = vmatprep.subr.mxu0 0.0
        %414 = vmatpush1.msra.mxu0 0.0
        %415 = vmatprep.subr.mxu0 0.0
        %416 = vmatpush1.msra.mxu0 0.0
        %417 = vmatprep.subr.mxu0 0.0
        %418 = vmatpush1.msra.mxu0 0.0
        %419 = vmatprep.subr.mxu0 0.0
        %420 = vmatpush1.msra.mxu0 0.0
        %421 = vmatprep.subr.mxu0 0.0
        %422 = vmatpush1.msra.mxu0 0.0
        %423 = vmatprep.subr.mxu0 0.0
        %424 = vmatpush1.msra.mxu0 0.0
        %425 = vmatprep.subr.mxu0 0.0
        %426 = vmatpush1.msra.mxu0 0.0
        %427 = vmatprep.subr.mxu0 0.0
        %428 = vmatpush1.msra.mxu0 0.0
        %429 = vmatprep.subr.mxu0 0.0
        %430 = vmatpush1.msra.mxu0 0.0
        %431 = vmatprep.subr.mxu0 0.0
        %432 = vmatpush1.msra.mxu0 0.0
        %433 = vmatprep.mubr.f32.mxu0 0.0
        %434 = vmatmul.mubr.f32.gmra.mrb[0].mxu0 %v336
        %v435 = vpop.f32.mrb[0].mxu0
        %v436 = vadd.f32 %v367, %v435
        %v437 = vpop.f32.mrb[0].mxu0
        %438 = vmatprep.mubr.f32.mxu0 0.0
        %439 = vmatmul.mubr.f32.gmra.mrb[0].mxu0 %v337
        %v440 = vpop.f32.mrb[0].mxu0
        %v441 = vadd.f32 %v367, %v440
        %v442 = vpop.f32.mrb[0].mxu0
        %443 = vmatprep.mubr.f32.mxu0 0.0
        %444 = vmatmul.mubr.f32.gmra.mrb[0].mxu0 %v338
        %v445 = vpop.f32.mrb[0].mxu0
        %v446 = vadd.f32 %v367, %v445
        %v447 = vpop.f32.mrb[0].mxu0
        %448 = vmatprep.mubr.f32.mxu0 0.0
        %449 = vmatmul.mubr.f32.gmra.mrb[0].mxu0 %v339
        %v450 = vpop.f32.mrb[0].mxu0
        %v451 = vadd.f32 %v367, %v450
        %v452 = vpop.f32.mrb[0].mxu0
        %453 = vmatprep.mubr.f32.mxu0 0.0
        %454 = vmatmul.mubr.f32.gmra.mrb[0].mxu0 %v340
        %v455 = vpop.f32.mrb[0].mxu0
        %v456 = vadd.f32 %v367, %v455
        %v457 = vpop.f32.mrb[0].mxu0
        %458 = vmatprep.mubr.f32.mxu0 0.0
        %459 = vmatmul.mubr.f32.gmra.mrb[0].mxu0 %v341
        %v460 = vpop.f32.mrb[0].mxu0
        %v461 = vadd.f32 %v367, %v460
        %v462 = vpop.f32.mrb[0].mxu0
        %463 = vmatprep.mubr.f32.mxu0 0.0
        %464 = vmatmul.mubr.f32.gmra.mrb[0].mxu0 %v342
        %v465 = vpop.f32.mrb[0].mxu0
        %v466 = vadd.f32 %v367, %v465
        %v467 = vpop.f32.mrb[0].mxu0
        %468 = vmatprep.mubr.f32.mxu0 0.0
        %469 = vmatmul.mubr.f32.gmra.mrb[0].mxu0 %v343
        %v470 = vpop.f32.mrb[0].mxu0
        %v471 = vadd.f32 %v367, %v470
        %v472 = vpop.f32.mrb[0].mxu0
        %473 = vdwg.mxu0
        %v474 = vmax.f32 %v436, 0.0
        %v475 = vmax.f32 %v441, 0.0
        %v476 = vmax.f32 %v446, 0.0
        %v477 = vmax.f32 %v451, 0.0
        %v478 = vmax.f32 %v456, 0.0
        %v479 = vmax.f32 %v461, 0.0
        %v480 = vmax.f32 %v466, 0.0
        %v481 = vmax.f32 %v471, 0.0
        %s482 = scalar_lea.vmem [#allocation2], 256
        %v483 = vld [vmem:[%s482] sm:$0xff]
        %v484 = vld [vmem:[%s482 + $0x8] sm:$0xff]
        %v485 = vld [vmem:[%s482 + $0x10] sm:$0xff]
        %v486 = vld [vmem:[%s482 + $0x18] sm:$0xff]
        %v487 = vld [vmem:[%s482 + $0x20] sm:$0xff]
        %v488 = vld [vmem:[%s482 + $0x28] sm:$0xff]
        %v489 = vld [vmem:[%s482 + $0x30] sm:$0xff]
        %v490 = vld [vmem:[%s482 + $0x38] sm:$0xff]
        %v491 = vld [vmem:[%s482 + $0x40] sm:$0xff]
        %v492 = vld [vmem:[%s482 + $0x48] sm:$0xff]
        %v493 = vld [vmem:[%s482 + $0x50] sm:$0xff]
        %v494 = vld [vmem:[%s482 + $0x58] sm:$0xff]
        %v495 = vld [vmem:[%s482 + $0x60] sm:$0xff]
        %v496 = vld [vmem:[%s482 + $0x68] sm:$0xff]
        %v497 = vld [vmem:[%s482 + $0x70] sm:$0xff]
        %v498 = vld [vmem:[%s482 + $0x78] sm:$0xff]
        %s499 = scalar_lea.vmem %s2, 2
        %v500 = vld [vmem:[%s499] sm:$0x1]
        %v502 = vlaneseq
        %v503 = vshrl.u32 %v502, 7
        %v504 = vsub.s32 0, %v503
        %v505 = vrot.slane %v500, %v504
        %507 = vmatprep.subr.mxu0 0.0
        %508 = vmatpush1.msra.mxu0 %v483
        %509 = vmatprep.subr.mxu0 0.0
        %510 = vmatpush1.msra.mxu0 %v484
        %511 = vmatprep.subr.mxu0 0.0
        %512 = vmatpush1.msra.mxu0 %v485
        %513 = vmatprep.subr.mxu0 0.0
        %514 = vmatpush1.msra.mxu0 %v486
        %515 = vmatprep.subr.mxu0 0.0
        %516 = vmatpush1.msra.mxu0 %v487
        %517 = vmatprep.subr.mxu0 0.0
        %518 = vmatpush1.msra.mxu0 %v488
        %519 = vmatprep.subr.mxu0 0.0
        %520 = vmatpush1.msra.mxu0 %v489
        %521 = vmatprep.subr.mxu0 0.0
        %522 = vmatpush1.msra.mxu0 %v490
        %523 = vmatprep.subr.mxu0 0.0
        %524 = vmatpush1.msra.mxu0 %v491
        %525 = vmatprep.subr.mxu0 0.0
        %526 = vmatpush1.msra.mxu0 %v492
        %527 = vmatprep.subr.mxu0 0.0
        %528 = vmatpush1.msra.mxu0 %v493
        %529 = vmatprep.subr.mxu0 0.0
        %530 = vmatpush1.msra.mxu0 %v494
        %531 = vmatprep.subr.mxu0 0.0
        %532 = vmatpush1.msra.mxu0 %v495
        %533 = vmatprep.subr.mxu0 0.0
        %534 = vmatpush1.msra.mxu0 %v496
        %535 = vmatprep.subr.mxu0 0.0
        %536 = vmatpush1.msra.mxu0 %v497
        %537 = vmatprep.subr.mxu0 0.0
        %538 = vmatpush1.msra.mxu0 %v498
        %539 = vmatprep.subr.mxu0 0.0
        %540 = vmatpush1.msra.mxu0 0.0
        %541 = vmatprep.subr.mxu0 0.0
        %542 = vmatpush1.msra.mxu0 0.0
        %543 = vmatprep.subr.mxu0 0.0
        %544 = vmatpush1.msra.mxu0 0.0
        %545 = vmatprep.subr.mxu0 0.0
        %546 = vmatpush1.msra.mxu0 0.0
        %547 = vmatprep.subr.mxu0 0.0
        %548 = vmatpush1.msra.mxu0 0.0
        %549 = vmatprep.subr.mxu0 0.0
        %550 = vmatpush1.msra.mxu0 0.0
        %551 = vmatprep.subr.mxu0 0.0
        %552 = vmatpush1.msra.mxu0 0.0
        %553 = vmatprep.subr.mxu0 0.0
        %554 = vmatpush1.msra.mxu0 0.0
        %555 = vmatprep.subr.mxu0 0.0
        %556 = vmatpush1.msra.mxu0 0.0
        %557 = vmatprep.subr.mxu0 0.0
        %558 = vmatpush1.msra.mxu0 0.0
        %559 = vmatprep.subr.mxu0 0.0
        %560 = vmatpush1.msra.mxu0 0.0
        %561 = vmatprep.subr.mxu0 0.0
        %562 = vmatpush1.msra.mxu0 0.0
        %563 = vmatprep.subr.mxu0 0.0
        %564 = vmatpush1.msra.mxu0 0.0
        %565 = vmatprep.subr.mxu0 0.0
        %566 = vmatpush1.msra.mxu0 0.0
        %567 = vmatprep.subr.mxu0 0.0
        %568 = vmatpush1.msra.mxu0 0.0
        %569 = vmatprep.subr.mxu0 0.0
        %570 = vmatpush1.msra.mxu0 0.0
        %571 = vmatprep.mubr.f32.mxu0 0.0
        %572 = vmatmul.mubr.f32.gmra.mrb[0].mxu0 %v474
        %v573 = vpop.f32.mrb[0].mxu0
        %v574 = vadd.f32 %v505, %v573
        %v575 = vpop.f32.mrb[0].mxu0
        %576 = vmatprep.mubr.f32.mxu0 0.0
        %577 = vmatmul.mubr.f32.gmra.mrb[0].mxu0 %v475
        %v578 = vpop.f32.mrb[0].mxu0
        %v579 = vadd.f32 %v505, %v578
        %v580 = vpop.f32.mrb[0].mxu0
        %581 = vmatprep.mubr.f32.mxu0 0.0
        %582 = vmatmul.mubr.f32.gmra.mrb[0].mxu0 %v476
        %v583 = vpop.f32.mrb[0].mxu0
        %v584 = vadd.f32 %v505, %v583
        %v585 = vpop.f32.mrb[0].mxu0
        %586 = vmatprep.mubr.f32.mxu0 0.0
        %587 = vmatmul.mubr.f32.gmra.mrb[0].mxu0 %v477
        %v588 = vpop.f32.mrb[0].mxu0
        %v589 = vadd.f32 %v505, %v588
        %v590 = vpop.f32.mrb[0].mxu0
        %591 = vmatprep.mubr.f32.mxu0 0.0
        %592 = vmatmul.mubr.f32.gmra.mrb[0].mxu0 %v478
        %v593 = vpop.f32.mrb[0].mxu0
        %v594 = vadd.f32 %v505, %v593
        %v595 = vpop.f32.mrb[0].mxu0
        %596 = vmatprep.mubr.f32.mxu0 0.0
        %597 = vmatmul.mubr.f32.gmra.mrb[0].mxu0 %v479
        %v598 = vpop.f32.mrb[0].mxu0
        %v599 = vadd.f32 %v505, %v598
        %v600 = vpop.f32.mrb[0].mxu0
        %601 = vmatprep.mubr.f32.mxu0 0.0
        %602 = vmatmul.mubr.f32.gmra.mrb[0].mxu0 %v480
        %v603 = vpop.f32.mrb[0].mxu0
        %v604 = vadd.f32 %v505, %v603
        %v605 = vpop.f32.mrb[0].mxu0
        %606 = vmatprep.mubr.f32.mxu0 0.0
        %607 = vmatmul.mubr.f32.gmra.mrb[0].mxu0 %v481
        %v608 = vpop.f32.mrb[0].mxu0
        %v609 = vadd.f32 %v505, %v608
        %v610 = vpop.f32.mrb[0].mxu0
        %611 = vdwg.mxu0
        %v612 = vmax.f32 %v574, 0.0
        %v613 = vmax.f32 %v579, 0.0
        %v614 = vmax.f32 %v584, 0.0
        %v615 = vmax.f32 %v589, 0.0
        %v616 = vmax.f32 %v594, 0.0
        %v617 = vmax.f32 %v599, 0.0
        %v618 = vmax.f32 %v604, 0.0
        %v619 = vmax.f32 %v609, 0.0
        %s620 = scalar_lea.vmem [#allocation2], 384
        %v621 = vld [vmem:[%s620] sm:$0xff]
        %v622 = vld [vmem:[%s620 + $0x8] sm:$0xff]
        %v623 = vld [vmem:[%s620 + $0x10] sm:$0xff]
        %v624 = vld [vmem:[%s620 + $0x18] sm:$0xff]
        %v625 = vld [vmem:[%s620 + $0x20] sm:$0xff]
        %v626 = vld [vmem:[%s620 + $0x28] sm:$0xff]
        %v627 = vld [vmem:[%s620 + $0x30] sm:$0xff]
        %v628 = vld [vmem:[%s620 + $0x38] sm:$0xff]
        %v629 = vld [vmem:[%s620 + $0x40] sm:$0xff]
        %v630 = vld [vmem:[%s620 + $0x48] sm:$0xff]
        %v631 = vld [vmem:[%s620 + $0x50] sm:$0xff]
        %v632 = vld [vmem:[%s620 + $0x58] sm:$0xff]
        %v633 = vld [vmem:[%s620 + $0x60] sm:$0xff]
        %v634 = vld [vmem:[%s620 + $0x68] sm:$0xff]
        %v635 = vld [vmem:[%s620 + $0x70] sm:$0xff]
        %v636 = vld [vmem:[%s620 + $0x78] sm:$0xff]
        %s637 = scalar_lea.vmem %s2, 3
        %v638 = vld [vmem:[%s637] sm:$0x1]
        %v640 = vlaneseq
        %v641 = vshrl.u32 %v640, 7
        %v642 = vsub.s32 0, %v641
        %v643 = vrot.slane %v638, %v642
        %645 = vmatprep.subr.mxu0 0.0
        %646 = vmatpush1.msra.mxu0 %v621
        %647 = vmatprep.subr.mxu0 0.0
        %648 = vmatpush1.msra.mxu0 %v622
        %649 = vmatprep.subr.mxu0 0.0
        %650 = vmatpush1.msra.mxu0 %v623
        %651 = vmatprep.subr.mxu0 0.0
        %652 = vmatpush1.msra.mxu0 %v624
        %653 = vmatprep.subr.mxu0 0.0
        %654 = vmatpush1.msra.mxu0 %v625
        %655 = vmatprep.subr.mxu0 0.0
        %656 = vmatpush1.msra.mxu0 %v626
        %657 = vmatprep.subr.mxu0 0.0
        %658 = vmatpush1.msra.mxu0 %v627
        %659 = vmatprep.subr.mxu0 0.0
        %660 = vmatpush1.msra.mxu0 %v628
        %661 = vmatprep.subr.mxu0 0.0
        %662 = vmatpush1.msra.mxu0 %v629
        %663 = vmatprep.subr.mxu0 0.0
        %664 = vmatpush1.msra.mxu0 %v630
        %665 = vmatprep.subr.mxu0 0.0
        %666 = vmatpush1.msra.mxu0 %v631
        %667 = vmatprep.subr.mxu0 0.0
        %668 = vmatpush1.msra.mxu0 %v632
        %669 = vmatprep.subr.mxu0 0.0
        %670 = vmatpush1.msra.mxu0 %v633
        %671 = vmatprep.subr.mxu0 0.0
        %672 = vmatpush1.msra.mxu0 %v634
        %673 = vmatprep.subr.mxu0 0.0
        %674 = vmatpush1.msra.mxu0 %v635
        %675 = vmatprep.subr.mxu0 0.0
        %676 = vmatpush1.msra.mxu0 %v636
        %677 = vmatprep.subr.mxu0 0.0
        %678 = vmatpush1.msra.mxu0 0.0
        %679 = vmatprep.subr.mxu0 0.0
        %680 = vmatpush1.msra.mxu0 0.0
        %681 = vmatprep.subr.mxu0 0.0
        %682 = vmatpush1.msra.mxu0 0.0
        %683 = vmatprep.subr.mxu0 0.0
        %684 = vmatpush1.msra.mxu0 0.0
        %685 = vmatprep.subr.mxu0 0.0
        %686 = vmatpush1.msra.mxu0 0.0
        %687 = vmatprep.subr.mxu0 0.0
        %688 = vmatpush1.msra.mxu0 0.0
        %689 = vmatprep.subr.mxu0 0.0
        %690 = vmatpush1.msra.mxu0 0.0
        %691 = vmatprep.subr.mxu0 0.0
        %692 = vmatpush1.msra.mxu0 0.0
        %693 = vmatprep.subr.mxu0 0.0
        %694 = vmatpush1.msra.mxu0 0.0
        %695 = vmatprep.subr.mxu0 0.0
        %696 = vmatpush1.msra.mxu0 0.0
        %697 = vmatprep.subr.mxu0 0.0
        %698 = vmatpush1.msra.mxu0 0.0
        %699 = vmatprep.subr.mxu0 0.0
        %700 = vmatpush1.msra.mxu0 0.0
        %701 = vmatprep.subr.mxu0 0.0
        %702 = vmatpush1.msra.mxu0 0.0
        %703 = vmatprep.subr.mxu0 0.0
        %704 = vmatpush1.msra.mxu0 0.0
        %705 = vmatprep.subr.mxu0 0.0
        %706 = vmatpush1.msra.mxu0 0.0
        %707 = vmatprep.subr.mxu0 0.0
        %708 = vmatpush1.msra.mxu0 0.0
        %709 = vmatprep.mubr.f32.mxu0 0.0
        %710 = vmatmul.mubr.f32.gmra.mrb[0].mxu0 %v612
        %v711 = vpop.f32.mrb[0].mxu0
        %v712 = vadd.f32 %v643, %v711
        %v713 = vpop.f32.mrb[0].mxu0
        %714 = vmatprep.mubr.f32.mxu0 0.0
        %715 = vmatmul.mubr.f32.gmra.mrb[0].mxu0 %v613
        %v716 = vpop.f32.mrb[0].mxu0
        %v717 = vadd.f32 %v643, %v716
        %v718 = vpop.f32.mrb[0].mxu0
        %719 = vmatprep.mubr.f32.mxu0 0.0
        %720 = vmatmul.mubr.f32.gmra.mrb[0].mxu0 %v614
        %v721 = vpop.f32.mrb[0].mxu0
        %v722 = vadd.f32 %v643, %v721
        %v723 = vpop.f32.mrb[0].mxu0
        %724 = vmatprep.mubr.f32.mxu0 0.0
        %725 = vmatmul.mubr.f32.gmra.mrb[0].mxu0 %v615
        %v726 = vpop.f32.mrb[0].mxu0
        %v727 = vadd.f32 %v643, %v726
        %v728 = vpop.f32.mrb[0].mxu0
        %729 = vmatprep.mubr.f32.mxu0 0.0
        %730 = vmatmul.mubr.f32.gmra.mrb[0].mxu0 %v616
        %v731 = vpop.f32.mrb[0].mxu0
        %v732 = vadd.f32 %v643, %v731
        %v733 = vpop.f32.mrb[0].mxu0
        %734 = vmatprep.mubr.f32.mxu0 0.0
        %735 = vmatmul.mubr.f32.gmra.mrb[0].mxu0 %v617
        %v736 = vpop.f32.mrb[0].mxu0
        %v737 = vadd.f32 %v643, %v736
        %v738 = vpop.f32.mrb[0].mxu0
        %739 = vmatprep.mubr.f32.mxu0 0.0
        %740 = vmatmul.mubr.f32.gmra.mrb[0].mxu0 %v618
        %v741 = vpop.f32.mrb[0].mxu0
        %v742 = vadd.f32 %v643, %v741
        %v743 = vpop.f32.mrb[0].mxu0
        %744 = vmatprep.mubr.f32.mxu0 0.0
        %745 = vmatmul.mubr.f32.gmra.mrb[0].mxu0 %v619
        %v746 = vpop.f32.mrb[0].mxu0
        %v747 = vadd.f32 %v643, %v746
        %v748 = vpop.f32.mrb[0].mxu0
        %749 = vdwg.mxu0
        %v750 = vmax.f32 %v712, 0.0
        %v751 = vmax.f32 %v717, 0.0
        %v752 = vmax.f32 %v722, 0.0
        %v753 = vmax.f32 %v727, 0.0
        %v754 = vmax.f32 %v732, 0.0
        %v755 = vmax.f32 %v737, 0.0
        %v756 = vmax.f32 %v742, 0.0
        %v757 = vmax.f32 %v747, 0.0
        %s758 = scalar_lea.vmem [#allocation2], 512
        %v759 = vld [vmem:[%s758] sm:$0xff]
        %v760 = vld [vmem:[%s758 + $0x8] sm:$0xff]
        %v761 = vld [vmem:[%s758 + $0x10] sm:$0xff]
        %v762 = vld [vmem:[%s758 + $0x18] sm:$0xff]
        %v763 = vld [vmem:[%s758 + $0x20] sm:$0xff]
        %v764 = vld [vmem:[%s758 + $0x28] sm:$0xff]
        %v765 = vld [vmem:[%s758 + $0x30] sm:$0xff]
        %v766 = vld [vmem:[%s758 + $0x38] sm:$0xff]
        %v767 = vld [vmem:[%s758 + $0x40] sm:$0xff]
        %v768 = vld [vmem:[%s758 + $0x48] sm:$0xff]
        %v769 = vld [vmem:[%s758 + $0x50] sm:$0xff]
        %v770 = vld [vmem:[%s758 + $0x58] sm:$0xff]
        %v771 = vld [vmem:[%s758 + $0x60] sm:$0xff]
        %v772 = vld [vmem:[%s758 + $0x68] sm:$0xff]
        %v773 = vld [vmem:[%s758 + $0x70] sm:$0xff]
        %v774 = vld [vmem:[%s758 + $0x78] sm:$0xff]
        %s775 = scalar_lea.vmem %s2, 4
        %v776 = vld [vmem:[%s775] sm:$0x1]
        %v778 = vlaneseq
        %v779 = vshrl.u32 %v778, 7
        %v780 = vsub.s32 0, %v779
        %v781 = vrot.slane %v776, %v780
        %783 = vmatprep.subr.mxu0 0.0
        %784 = vmatpush1.msra.mxu0 %v759
        %785 = vmatprep.subr.mxu0 0.0
        %786 = vmatpush1.msra.mxu0 %v760
        %787 = vmatprep.subr.mxu0 0.0
        %788 = vmatpush1.msra.mxu0 %v761
        %789 = vmatprep.subr.mxu0 0.0
        %790 = vmatpush1.msra.mxu0 %v762
        %791 = vmatprep.subr.mxu0 0.0
        %792 = vmatpush1.msra.mxu0 %v763
        %793 = vmatprep.subr.mxu0 0.0
        %794 = vmatpush1.msra.mxu0 %v764
        %795 = vmatprep.subr.mxu0 0.0
        %796 = vmatpush1.msra.mxu0 %v765
        %797 = vmatprep.subr.mxu0 0.0
        %798 = vmatpush1.msra.mxu0 %v766
        %799 = vmatprep.subr.mxu0 0.0
        %800 = vmatpush1.msra.mxu0 %v767
        %801 = vmatprep.subr.mxu0 0.0
        %802 = vmatpush1.msra.mxu0 %v768
        %803 = vmatprep.subr.mxu0 0.0
        %804 = vmatpush1.msra.mxu0 %v769
        %805 = vmatprep.subr.mxu0 0.0
        %806 = vmatpush1.msra.mxu0 %v770
        %807 = vmatprep.subr.mxu0 0.0
        %808 = vmatpush1.msra.mxu0 %v771
        %809 = vmatprep.subr.mxu0 0.0
        %810 = vmatpush1.msra.mxu0 %v772
        %811 = vmatprep.subr.mxu0 0.0
        %812 = vmatpush1.msra.mxu0 %v773
        %813 = vmatprep.subr.mxu0 0.0
        %814 = vmatpush1.msra.mxu0 %v774
        %815 = vmatprep.subr.mxu0 0.0
        %816 = vmatpush1.msra.mxu0 0.0
        %817 = vmatprep.subr.mxu0 0.0
        %818 = vmatpush1.msra.mxu0 0.0
        %819 = vmatprep.subr.mxu0 0.0
        %820 = vmatpush1.msra.mxu0 0.0
        %821 = vmatprep.subr.mxu0 0.0
        %822 = vmatpush1.msra.mxu0 0.0
        %823 = vmatprep.subr.mxu0 0.0
        %824 = vmatpush1.msra.mxu0 0.0
        %825 = vmatprep.subr.mxu0 0.0
        %826 = vmatpush1.msra.mxu0 0.0
        %827 = vmatprep.subr.mxu0 0.0
        %828 = vmatpush1.msra.mxu0 0.0
        %829 = vmatprep.subr.mxu0 0.0
        %830 = vmatpush1.msra.mxu0 0.0
        %831 = vmatprep.subr.mxu0 0.0
        %832 = vmatpush1.msra.mxu0 0.0
        %833 = vmatprep.subr.mxu0 0.0
        %834 = vmatpush1.msra.mxu0 0.0
        %835 = vmatprep.subr.mxu0 0.0
        %836 = vmatpush1.msra.mxu0 0.0
        %837 = vmatprep.subr.mxu0 0.0
        %838 = vmatpush1.msra.mxu0 0.0
        %839 = vmatprep.subr.mxu0 0.0
        %840 = vmatpush1.msra.mxu0 0.0
        %841 = vmatprep.subr.mxu0 0.0
        %842 = vmatpush1.msra.mxu0 0.0
        %843 = vmatprep.subr.mxu0 0.0
        %844 = vmatpush1.msra.mxu0 0.0
        %845 = vmatprep.subr.mxu0 0.0
        %846 = vmatpush1.msra.mxu0 0.0
        %847 = vmatprep.mubr.f32.mxu0 0.0
        %848 = vmatmul.mubr.f32.gmra.mrb[0].mxu0 %v750
        %v849 = vpop.f32.mrb[0].mxu0
        %v850 = vadd.f32 %v781, %v849
        %v851 = vpop.f32.mrb[0].mxu0
        %852 = vmatprep.mubr.f32.mxu0 0.0
        %853 = vmatmul.mubr.f32.gmra.mrb[0].mxu0 %v751
        %v854 = vpop.f32.mrb[0].mxu0
        %v855 = vadd.f32 %v781, %v854
        %v856 = vpop.f32.mrb[0].mxu0
        %857 = vmatprep.mubr.f32.mxu0 0.0
        %858 = vmatmul.mubr.f32.gmra.mrb[0].mxu0 %v752
        %v859 = vpop.f32.mrb[0].mxu0
        %v860 = vadd.f32 %v781, %v859
        %v861 = vpop.f32.mrb[0].mxu0
        %862 = vmatprep.mubr.f32.mxu0 0.0
        %863 = vmatmul.mubr.f32.gmra.mrb[0].mxu0 %v753
        %v864 = vpop.f32.mrb[0].mxu0
        %v865 = vadd.f32 %v781, %v864
        %v866 = vpop.f32.mrb[0].mxu0
        %867 = vmatprep.mubr.f32.mxu0 0.0
        %868 = vmatmul.mubr.f32.gmra.mrb[0].mxu0 %v754
        %v869 = vpop.f32.mrb[0].mxu0
        %v870 = vadd.f32 %v781, %v869
        %v871 = vpop.f32.mrb[0].mxu0
        %872 = vmatprep.mubr.f32.mxu0 0.0
        %873 = vmatmul.mubr.f32.gmra.mrb[0].mxu0 %v755
        %v874 = vpop.f32.mrb[0].mxu0
        %v875 = vadd.f32 %v781, %v874
        %v876 = vpop.f32.mrb[0].mxu0
        %877 = vmatprep.mubr.f32.mxu0 0.0
        %878 = vmatmul.mubr.f32.gmra.mrb[0].mxu0 %v756
        %v879 = vpop.f32.mrb[0].mxu0
        %v880 = vadd.f32 %v781, %v879
        %v881 = vpop.f32.mrb[0].mxu0
        %882 = vmatprep.mubr.f32.mxu0 0.0
        %883 = vmatmul.mubr.f32.gmra.mrb[0].mxu0 %v757
        %v884 = vpop.f32.mrb[0].mxu0
        %v885 = vadd.f32 %v781, %v884
        %v886 = vpop.f32.mrb[0].mxu0
        %887 = vdwg.mxu0
        %v888 = vmax.f32 %v850, 0.0
        %v889 = vmax.f32 %v855, 0.0
        %v890 = vmax.f32 %v860, 0.0
        %v891 = vmax.f32 %v865, 0.0
        %v892 = vmax.f32 %v870, 0.0
        %v893 = vmax.f32 %v875, 0.0
        %v894 = vmax.f32 %v880, 0.0
        %v895 = vmax.f32 %v885, 0.0
        %s896 = scalar_lea.vmem [#allocation2], 640
        %v897 = vld [vmem:[%s896] sm:$0xff]
        %v898 = vld [vmem:[%s896 + $0x8] sm:$0xff]
        %v899 = vld [vmem:[%s896 + $0x10] sm:$0xff]
        %v900 = vld [vmem:[%s896 + $0x18] sm:$0xff]
        %v901 = vld [vmem:[%s896 + $0x20] sm:$0xff]
        %v902 = vld [vmem:[%s896 + $0x28] sm:$0xff]
        %v903 = vld [vmem:[%s896 + $0x30] sm:$0xff]
        %v904 = vld [vmem:[%s896 + $0x38] sm:$0xff]
        %v905 = vld [vmem:[%s896 + $0x40] sm:$0xff]
        %v906 = vld [vmem:[%s896 + $0x48] sm:$0xff]
        %v907 = vld [vmem:[%s896 + $0x50] sm:$0xff]
        %v908 = vld [vmem:[%s896 + $0x58] sm:$0xff]
        %v909 = vld [vmem:[%s896 + $0x60] sm:$0xff]
        %v910 = vld [vmem:[%s896 + $0x68] sm:$0xff]
        %v911 = vld [vmem:[%s896 + $0x70] sm:$0xff]
        %v912 = vld [vmem:[%s896 + $0x78] sm:$0xff]
        %s913 = scalar_lea.vmem %s2, 5
        %v914 = vld [vmem:[%s913] sm:$0x1]
        %v916 = vlaneseq
        %v917 = vshrl.u32 %v916, 7
        %v918 = vsub.s32 0, %v917
        %v919 = vrot.slane %v914, %v918
        %921 = vmatprep.subr.mxu0 0.0
        %922 = vmatpush1.msra.mxu0 %v897
        %923 = vmatprep.subr.mxu0 0.0
        %924 = vmatpush1.msra.mxu0 %v898
        %925 = vmatprep.subr.mxu0 0.0
        %926 = vmatpush1.msra.mxu0 %v899
        %927 = vmatprep.subr.mxu0 0.0
        %928 = vmatpush1.msra.mxu0 %v900
        %929 = vmatprep.subr.mxu0 0.0
        %930 = vmatpush1.msra.mxu0 %v901
        %931 = vmatprep.subr.mxu0 0.0
        %932 = vmatpush1.msra.mxu0 %v902
        %933 = vmatprep.subr.mxu0 0.0
        %934 = vmatpush1.msra.mxu0 %v903
        %935 = vmatprep.subr.mxu0 0.0
        %936 = vmatpush1.msra.mxu0 %v904
        %937 = vmatprep.subr.mxu0 0.0
        %938 = vmatpush1.msra.mxu0 %v905
        %939 = vmatprep.subr.mxu0 0.0
        %940 = vmatpush1.msra.mxu0 %v906
        %941 = vmatprep.subr.mxu0 0.0
        %942 = vmatpush1.msra.mxu0 %v907
        %943 = vmatprep.subr.mxu0 0.0
        %944 = vmatpush1.msra.mxu0 %v908
        %945 = vmatprep.subr.mxu0 0.0
        %946 = vmatpush1.msra.mxu0 %v909
        %947 = vmatprep.subr.mxu0 0.0
        %948 = vmatpush1.msra.mxu0 %v910
        %949 = vmatprep.subr.mxu0 0.0
        %950 = vmatpush1.msra.mxu0 %v911
        %951 = vmatprep.subr.mxu0 0.0
        %952 = vmatpush1.msra.mxu0 %v912
        %953 = vmatprep.subr.mxu0 0.0
        %954 = vmatpush1.msra.mxu0 0.0
        %955 = vmatprep.subr.mxu0 0.0
        %956 = vmatpush1.msra.mxu0 0.0
        %957 = vmatprep.subr.mxu0 0.0
        %958 = vmatpush1.msra.mxu0 0.0
        %959 = vmatprep.subr.mxu0 0.0
        %960 = vmatpush1.msra.mxu0 0.0
        %961 = vmatprep.subr.mxu0 0.0
        %962 = vmatpush1.msra.mxu0 0.0
        %963 = vmatprep.subr.mxu0 0.0
        %964 = vmatpush1.msra.mxu0 0.0
        %965 = vmatprep.subr.mxu0 0.0
        %966 = vmatpush1.msra.mxu0 0.0
        %967 = vmatprep.subr.mxu0 0.0
        %968 = vmatpush1.msra.mxu0 0.0
        %969 = vmatprep.subr.mxu0 0.0
        %970 = vmatpush1.msra.mxu0 0.0
        %971 = vmatprep.subr.mxu0 0.0
        %972 = vmatpush1.msra.mxu0 0.0
        %973 = vmatprep.subr.mxu0 0.0
        %974 = vmatpush1.msra.mxu0 0.0
        %975 = vmatprep.subr.mxu0 0.0
        %976 = vmatpush1.msra.mxu0 0.0
        %977 = vmatprep.subr.mxu0 0.0
        %978 = vmatpush1.msra.mxu0 0.0
        %979 = vmatprep.subr.mxu0 0.0
        %980 = vmatpush1.msra.mxu0 0.0
        %981 = vmatprep.subr.mxu0 0.0
        %982 = vmatpush1.msra.mxu0 0.0
        %983 = vmatprep.subr.mxu0 0.0
        %984 = vmatpush1.msra.mxu0 0.0
        %985 = vmatprep.mubr.f32.mxu0 0.0
        %986 = vmatmul.mubr.f32.gmra.mrb[0].mxu0 %v888
        %v987 = vpop.f32.mrb[0].mxu0
        %v988 = vadd.f32 %v919, %v987
        %v989 = vpop.f32.mrb[0].mxu0
        %990 = vmatprep.mubr.f32.mxu0 0.0
        %991 = vmatmul.mubr.f32.gmra.mrb[0].mxu0 %v889
        %v992 = vpop.f32.mrb[0].mxu0
        %v993 = vadd.f32 %v919, %v992
        %v994 = vpop.f32.mrb[0].mxu0
        %995 = vmatprep.mubr.f32.mxu0 0.0
        %996 = vmatmul.mubr.f32.gmra.mrb[0].mxu0 %v890
        %v997 = vpop.f32.mrb[0].mxu0
        %v998 = vadd.f32 %v919, %v997
        %v999 = vpop.f32.mrb[0].mxu0
        %1000 = vmatprep.mubr.f32.mxu0 0.0
        %1001 = vmatmul.mubr.f32.gmra.mrb[0].mxu0 %v891
        %v1002 = vpop.f32.mrb[0].mxu0
        %v1003 = vadd.f32 %v919, %v1002
        %v1004 = vpop.f32.mrb[0].mxu0
        %1005 = vmatprep.mubr.f32.mxu0 0.0
        %1006 = vmatmul.mubr.f32.gmra.mrb[0].mxu0 %v892
        %v1007 = vpop.f32.mrb[0].mxu0
        %v1008 = vadd.f32 %v919, %v1007
        %v1009 = vpop.f32.mrb[0].mxu0
        %1010 = vmatprep.mubr.f32.mxu0 0.0
        %1011 = vmatmul.mubr.f32.gmra.mrb[0].mxu0 %v893
        %v1012 = vpop.f32.mrb[0].mxu0
        %v1013 = vadd.f32 %v919, %v1012
        %v1014 = vpop.f32.mrb[0].mxu0
        %1015 = vmatprep.mubr.f32.mxu0 0.0
        %1016 = vmatmul.mubr.f32.gmra.mrb[0].mxu0 %v894
        %v1017 = vpop.f32.mrb[0].mxu0
        %v1018 = vadd.f32 %v919, %v1017
        %v1019 = vpop.f32.mrb[0].mxu0
        %1020 = vmatprep.mubr.f32.mxu0 0.0
        %1021 = vmatmul.mubr.f32.gmra.mrb[0].mxu0 %v895
        %v1022 = vpop.f32.mrb[0].mxu0
        %v1023 = vadd.f32 %v919, %v1022
        %v1024 = vpop.f32.mrb[0].mxu0
        %1025 = vdwg.mxu0
        %1026 = vst [vmem:[%s179] sm:$0xff] %v988
        %1027 = vst [vmem:[%s179 + $0x8] sm:$0xff] %v993
        %1028 = vst [vmem:[%s179 + $0x10] sm:$0xff] %v998
        %1029 = vst [vmem:[%s179 + $0x18] sm:$0xff] %v1003
        %1030 = vst [vmem:[%s179 + $0x20] sm:$0xff] %v1008
        %1031 = vst [vmem:[%s179 + $0x28] sm:$0xff] %v1013
        %1032 = vst [vmem:[%s179 + $0x30] sm:$0xff] %v1018
        %1033 = vst [vmem:[%s179 + $0x38] sm:$0xff] %v1023
        %s1034 = sand.u32 %s94, 1
        %s1035 = scalar_lea.sflag [#allocation4], %s1034
        %s1036 = sand.u32 %s94, 1
        %s1037 = smul.addr %s1036, 64
        %s1038 = scalar_lea.vmem [#allocation5], %s1037
        // Predicated region
        $region37: #{tpu_custom_call.1} parent=31 // pred_check
          %p1039 = pneg %p104
        $region38: #{tpu_custom_call.1} parent=31 // pred_check_branch
          %1041 = sbr.rel (%p1039) target = $region40
        $region39: #{tpu_custom_call.1} parent=31 // pred_region
          %s1042 = smul.u32 8, %s18
          %s1044 = ssub.s32 1024, 1024
          %1045 = vsyncadd %s1035, %s1044
          %s1046 = smul.addr %s1042, 128
          %s1047 = scalar_lea.hbm %s3, %s1046
          %s1048 = sshll.u32 %s1038, 4
          %s1049 = int_to_ptr.vmem [resolvable:$true] %s1048
          %1054 = dma.vmem_to_hbm [thread:$0]  %s1049, 1024, %s1047, %s1035, 128, 128, 8
        $region40: #{tpu_custom_call.1} parent=31 // pred_fallthru
          _
      $region32: #{tpu_custom_call.1} parent=5 // pred_fallthru
        _
      %p1055 = scmp.le.s32.totalorder 2, %s13
      // Predicated region
      $region41: #{tpu_custom_call.1} parent=5 // pred_check
        %p1056 = pneg %p1055
      $region42: #{tpu_custom_call.1} parent=5 // pred_check_branch
        %1058 = sbr.rel (%p1056) target = $region44
      $region43: #{tpu_custom_call.1} parent=5 // pred_region
        %s1059 = ssub.s32 %s13, 2
        // Predicated region
        $region45: #{tpu_custom_call.1} parent=43 // pred_check
          %p1060 = pneg %p110
        $region46: #{tpu_custom_call.1} parent=43 // pred_check_branch
          %1062 = sbr.rel (%p1060) target = $region48
        $region47: #{tpu_custom_call.1} parent=43 // pred_region
          %s1063 = sand.u32 %s95, 1
          %s1064 = scalar_lea.sflag [#allocation4], %s1063
          %s1065 = sand.u32 %s95, 1
          %s1066 = smul.addr %s1065, 64
          %s1067 = scalar_lea.vmem [#allocation5], %s1066
          %1068 = dma.done %s1064, 1024
        $region48: #{tpu_custom_call.1} parent=43 // pred_fallthru
          _
      $region44: #{tpu_custom_call.1} parent=5 // pred_fallthru
        _
    $region6: #{tpu_custom_call.1} parent=1 // loop_footer
      %s17 = sadd.s32 1, %s13
    $region7: #{tpu_custom_call.1} parent=1 // loop_footer_branch
      %12 = sbr.rel target = $region3
    $region8: #{tpu_custom_call.1} parent=1 // loop_exit
      _
    %1069 = vsyncpa [#allocation3], 1
    %s1070 = scalar_lea.sflag [#allocation3], 1
    %1071 = vsyncpa %s1070, 1
    %1072 = vsyncpa [#allocation4], 1
    %s1073 = scalar_lea.sflag [#allocation4], 1
    %1074 = vsyncpa %s1073, 1

</llo_original>
